<compile_context>
chip_gen: v6e
topology: v6e:2x2x1
jax: 0.10.0
libtpu: 0.0.40
codegen_flags: <defaults>
</compile_context>

<pallas_src>
import jax
import jax.numpy as jnp
from jax.experimental import pallas as pl
from jax.experimental.pallas import tpu as pltpu

LANE = 128  # TPU lane width; total output width padded to a multiple of this


def _round_up(x, m):
    return (x + m - 1) // m * m


# ----------------------------------------------------------------------------
# Fused kernel. One grid step == one batch element.
#   x_ref    : (4*pp*N_pad, Cin)  gathered pixels, rows (dh, dw, ph, pw, n)
#   sw_ref   : (Cin, Cf)          1x1-conv stem weight
#   sb_ref   : (1, Cf)            stem bias (broadcast add)
#   wbig_ref : (pp, Cf, Wout)     per-(ph,pw) block-diag projection weight,
#                                 output columns packed (group c -> c*D..c*D+D)
#   add_ref  : (N_pad, Wout)      proj bias + positional embedding (resident)
#   o_ref    : (N_pad, Wout)      encoded patches for this batch element
# ----------------------------------------------------------------------------
def _fused_vit_kernel(x_ref, sw_ref, sb_ref, wbig_ref, add_ref, o_ref):
    # Stem: 1x1 conv + bias + ReLU over every gathered pixel of this batch elem.
    feat = jnp.dot(x_ref[...], sw_ref[...], preferred_element_type=jnp.float32)
    feat = jnp.maximum(feat + sb_ref[...], 0.0)              # (4*pp*N_pad, Cf)

    # 2x2 average pool: rows are ordered (dh, dw, ph, pw, n), so pooling is
    # three VPU adds of four contiguous slabs (no gather matrix, no matmul).
    s = feat.shape[0] // 4
    pooled = 0.25 * (feat[0:s] + feat[s:2 * s]
                     + feat[2 * s:3 * s] + feat[3 * s:4 * s])  # (pp*N_pad, Cf)

    # Patch projection: per-(ph, pw) block-diagonal weight over channel groups,
    # packed output columns. Static sublane-aligned slices of `pooled`; pp tiny
    # MXU dots accumulated in f32, initialized from bias + positional embedding.
    n_pad = o_ref.shape[0]
    pp = wbig_ref.shape[0]
    acc = add_ref[...]                                         # (N_pad, Wout)
    for q in range(pp):                                        # unrolled, static
        acc = acc + jnp.dot(pooled[q * n_pad:(q + 1) * n_pad], wbig_ref[q],
                            preferred_element_type=jnp.float32)
    o_ref[...] = acc


# ----------------------------------------------------------------------------
# Wrapper: parameter folding + input gather (tiny, once per call) + kernel.
# ----------------------------------------------------------------------------
def efficient_vit_transformer(x, params, patch_size):
    """x: [B, Cin, H, W] (NCHW)  ->  encoded patches [B, nC, N, proj_dim]."""
    B, Cin, H, W = x.shape
    stem_w, stem_b = params["stem_w"], params["stem_b"]
    proj_w, proj_b = params["proj_w"], params["proj_b"]
    pos = params["pos_embed"]
    Cf = stem_w.shape[1]
    D = proj_w.shape[1]
    p = patch_size
    pp = p * p

    nC = (Cf - p) // p + 1                      # channel-dim unfold groups
    nS = (H // 2 - p) // p + 1                  # spatial patches per side (post-pool)
    N = nS * nS
    N_pad = _round_up(N, 8)                     # sublane-aligned rows per batch elem
    Wout = max(_round_up(nC * D, LANE), LANE)   # packed, lane-dense output width

    # -- input gather: per batch element, rows ordered (dh, dw, ph, pw, nh, nw)
    #    so pooling / patch slicing inside the kernel are contiguous slices.
    hc = 2 * nS * p                                           # unfold crop (pre-pool)
    xg = jnp.transpose(x, (0, 2, 3, 1))[:, :hc, :hc, :]      # [B, hc, hc, Cin]
    xg = xg.reshape(B, nS, p, 2, nS, p, 2, Cin)               # h=(nh,ph,dh), w=(nw,pw,dw)
    xg = jnp.transpose(xg, (0, 3, 6, 2, 5, 1, 4, 7))          # (b,dh,dw,ph,pw,nh,nw,c)
    xg = xg.reshape(B, 4 * pp, N, Cin)
    xg = jnp.pad(xg, ((0, 0), (0, 0), (0, N_pad - N), (0, 0)))
    x_rows = xg.reshape(B * 4 * pp * N_pad, Cin)

    # -- fold the Linear patch projection into per-(ph,pw) block-diagonal
    #    weights with packed output columns; proj_w rows are ordered (pc,ph,pw).
    w4 = proj_w.reshape(p, p, p, D).transpose(1, 2, 0, 3)     # (ph, pw, pc, d)
    w4 = w4.reshape(pp, p, D)
    eye = jnp.eye(nC, dtype=proj_w.dtype)
    wbig = jnp.einsum("ce,qkd->qcked", eye, w4).reshape(pp, nC * p, nC * D)
    if nC * p < Cf:                   # channels dropped by the channel-dim unfold
        wbig = jnp.pad(wbig, ((0, 0), (0, Cf - nC * p), (0, 0)))
    wbig = jnp.pad(wbig, ((0, 0), (0, 0), (0, Wout - nC * D)))

    # -- proj bias + positional embedding: small resident table (N_pad, Wout),
    #    NOT tiled over batch; kernel reads it once (constant index_map).
    addterm = jnp.tile(proj_b + pos, (1, nC))                 # (N, nC*D)
    addterm = jnp.pad(addterm, ((0, N_pad - N), (0, Wout - nC * D)))

    rows_in = 4 * pp * N_pad
    out = pl.pallas_call(
        _fused_vit_kernel,
        out_shape=jax.ShapeDtypeStruct((B * N_pad, Wout), jnp.float32),
        grid=(B,),
        in_specs=[
            pl.BlockSpec((rows_in, Cin), lambda b: (b, 0)),
            pl.BlockSpec(stem_w.shape, lambda b: (0, 0)),
            pl.BlockSpec(stem_b.shape, lambda b: (0, 0)),
            pl.BlockSpec(wbig.shape, lambda b: (0, 0, 0)),
            pl.BlockSpec((N_pad, Wout), lambda b: (0, 0)),
        ],
        out_specs=pl.BlockSpec((N_pad, Wout), lambda b: (b, 0)),
        compiler_params=pltpu.CompilerParams(
            dimension_semantics=("parallel",)),
    )(x_rows, stem_w, stem_b, wbig, addterm)

    out = out.reshape(B, N_pad, Wout)[:, :N, :nC * D]         # strip row/lane pad
    out = out.reshape(B, N, nC, D)
    return jnp.transpose(out, (0, 2, 1, 3))                   # [B, nC, N, D]


# ----------------------------------------------------------------------------
# Params + pure-JAX reference helpers (for the sanity check only)
# ----------------------------------------------------------------------------
def init_params(key, cin, cf, patch_size, proj_dim):
    patch_dim = patch_size ** 3
    num_patches = (7 // patch_size) ** 2
    k = jax.random.split(key, 5)
    return {
        "stem_w": jax.random.normal(k[0], (cin, cf), jnp.float32) * 0.1,
        "stem_b": jax.random.normal(k[1], (1, cf), jnp.float32) * 0.1,
        "proj_w": jax.random.normal(k[2], (patch_dim, proj_dim), jnp.float32) * 0.1,
        "proj_b": jax.random.normal(k[3], (1, proj_dim), jnp.float32) * 0.1,
        "pos_embed": jax.random.normal(k[4], (num_patches, proj_dim), jnp.float32) * 0.1,
    }


def unfold_patches(feat, p):
    # feat: [B, C, 7, 7], torch-unfold over dims (1,2,3) with size=step=p
    B, C, H, W = feat.shape
    nC, nH, nW = (C - p) // p + 1, (H - p) // p + 1, (W - p) // p + 1
    x = feat[:, : nC * p, : nH * p, : nW * p]
    x = x.reshape(B, nC, p, nH, p, nW, p)
    x = x.transpose(0, 1, 3, 5, 2, 4, 6)                   # [B,nC,nH,nW,p,p,p]
    return x.reshape(B, nC, nH * nW, p ** 3)                # [B,nC,N,P]


if __name__ == "__main__":
    B, Cin, H, W = 2, 4, 14, 14
    Cf = 8
    patch_size = 2
    proj_dim = 32

    key = jax.random.PRNGKey(0)
    kx, kp = jax.random.split(key)
    x = jax.random.normal(kx, (B, Cin, H, W), jnp.float32)
    params = init_params(kp, Cin, Cf, patch_size, proj_dim)

    fwd = jax.jit(efficient_vit_transformer, static_argnums=2)
    out = fwd(x, params, patch_size)
    jax.block_until_ready(out)

    # --- sanity check against a pure-JAX reference of the same math ---
    feat_ref = jnp.maximum(
        jnp.einsum("bchw,cf->bfhw", x, params["stem_w"])
        + params["stem_b"][0][None, :, None, None], 0.0)
    feat_ref = feat_ref.reshape(B, Cf, H // 2, 2, W // 2, 2).mean(axis=(3, 5))
    patches_ref = unfold_patches(feat_ref, patch_size)
    enc_ref = (jnp.einsum("bcnp,pd->bcnd", patches_ref, params["proj_w"])
               + params["proj_b"][0] + params["pos_embed"])

    nC = (Cf - patch_size) // patch_size + 1
    N = (7 // patch_size) ** 2
    assert out.shape == (B, nC, N, proj_dim), out.shape
    # Both kernel and reference use default MXU precision; rounding differences
    # are O(1e-3), while any layout/logic bug would be O(0.1).
    max_err = float(jnp.max(jnp.abs(out - enc_ref)))
    assert max_err < 2e-2, f"mismatch vs reference: {max_err}"

    print("KERNEL_OK")
</pallas_src>

<mosaic_0001>
module attributes {stable_mosaic.version = 11 : i64} {
  func.func @_fused_vit_kernel(%arg0: i32, %arg1: memref<256x4xf32, #tpu.memory_space<vmem>>, %arg2: memref<4x8xf32, #tpu.memory_space<vmem>>, %arg3: memref<1x8xf32, #tpu.memory_space<vmem>>, %arg4: memref<4x8x128xf32, #tpu.memory_space<vmem>>, %arg5: memref<16x128xf32, #tpu.memory_space<vmem>>, %arg6: memref<16x128xf32, #tpu.memory_space<vmem>>) attributes {dimension_semantics = [#tpu.dimension_semantics<parallel>], iteration_bounds = array<i64: 2>, scalar_prefetch = 0 : i64, scratch_operands = 0 : i64, tpu.core_type = #tpu.core_type<tc>, window_params = [{transform_indices = @transform_0, window_bounds = array<i64: 256, 4>}, {pipeline_mode = #tpu.pipeline_mode<synchronous>, transform_indices = @transform_1, window_bounds = array<i64: 4, 8>}, {pipeline_mode = #tpu.pipeline_mode<synchronous>, transform_indices = @transform_2, window_bounds = array<i64: 1, 8>}, {pipeline_mode = #tpu.pipeline_mode<synchronous>, transform_indices = @transform_3, window_bounds = array<i64: 4, 8, 128>}, {pipeline_mode = #tpu.pipeline_mode<synchronous>, transform_indices = @transform_4, window_bounds = array<i64: 16, 128>}, {transform_indices = @transform_5, window_bounds = array<i64: 16, 128>}]} {
    %c0 = arith.constant 0 : index
    %c0_0 = arith.constant 0 : index
    %0 = vector.load %arg1[%c0, %c0_0] : memref<256x4xf32, #tpu.memory_space<vmem>>, vector<256x4xf32>
    %c0_1 = arith.constant 0 : index
    %c0_2 = arith.constant 0 : index
    %1 = vector.load %arg2[%c0_1, %c0_2] : memref<4x8xf32, #tpu.memory_space<vmem>>, vector<4x8xf32>
    %cst = arith.constant dense<0.000000e+00> : vector<256x8xf32>
    %2 = tpu.matmul %0, %1, %cst {dimension_numbers = #tpu.dot_dimension_numbers<[1], [0], [0], [1], [0, 0, 1, 1], [], []>} : vector<256x4xf32>, vector<4x8xf32>, vector<256x8xf32> -> vector<256x8xf32>
    %c0_3 = arith.constant 0 : index
    %c0_4 = arith.constant 0 : index
    %3 = vector.load %arg3[%c0_3, %c0_4] : memref<1x8xf32, #tpu.memory_space<vmem>>, vector<1x8xf32>
    %4 = vector.broadcast %3 : vector<1x8xf32> to vector<256x8xf32>
    %5 = arith.addf %2, %4 : vector<256x8xf32>
    %cst_5 = arith.constant 0.000000e+00 : f32
    %6 = vector.broadcast %cst_5 : f32 to vector<256x8xf32>
    %7 = arith.maximumf %5, %6 : vector<256x8xf32>
    %8 = vector.extract_strided_slice %7 {offsets = [0, 0], sizes = [64, 8], strides = [1, 1]} : vector<256x8xf32> to vector<64x8xf32>
    %9 = vector.extract_strided_slice %7 {offsets = [64, 0], sizes = [64, 8], strides = [1, 1]} : vector<256x8xf32> to vector<64x8xf32>
    %10 = arith.addf %8, %9 : vector<64x8xf32>
    %11 = vector.extract_strided_slice %7 {offsets = [128, 0], sizes = [64, 8], strides = [1, 1]} : vector<256x8xf32> to vector<64x8xf32>
    %12 = arith.addf %10, %11 : vector<64x8xf32>
    %13 = vector.extract_strided_slice %7 {offsets = [192, 0], sizes = [64, 8], strides = [1, 1]} : vector<256x8xf32> to vector<64x8xf32>
    %14 = arith.addf %12, %13 : vector<64x8xf32>
    %cst_6 = arith.constant 2.500000e-01 : f32
    %15 = vector.broadcast %cst_6 : f32 to vector<64x8xf32>
    %16 = arith.mulf %15, %14 : vector<64x8xf32>
    %c0_7 = arith.constant 0 : index
    %c0_8 = arith.constant 0 : index
    %17 = vector.load %arg5[%c0_7, %c0_8] : memref<16x128xf32, #tpu.memory_space<vmem>>, vector<16x128xf32>
    %18 = vector.extract_strided_slice %16 {offsets = [0, 0], sizes = [16, 8], strides = [1, 1]} : vector<64x8xf32> to vector<16x8xf32>
    %c0_9 = arith.constant 0 : index
    %c0_10 = arith.constant 0 : index
    %c0_11 = arith.constant 0 : index
    %19 = vector.load %arg4[%c0_9, %c0_10, %c0_11] : memref<4x8x128xf32, #tpu.memory_space<vmem>>, vector<1x8x128xf32>
    %20 = vector.shape_cast %19 : vector<1x8x128xf32> to vector<8x128xf32>
    %cst_12 = arith.constant dense<0.000000e+00> : vector<16x128xf32>
    %21 = tpu.matmul %18, %20, %cst_12 {dimension_numbers = #tpu.dot_dimension_numbers<[1], [0], [0], [1], [0, 0, 1, 1], [], []>} : vector<16x8xf32>, vector<8x128xf32>, vector<16x128xf32> -> vector<16x128xf32>
    %22 = arith.addf %17, %21 : vector<16x128xf32>
    %23 = vector.extract_strided_slice %16 {offsets = [16, 0], sizes = [16, 8], strides = [1, 1]} : vector<64x8xf32> to vector<16x8xf32>
    %c1 = arith.constant 1 : index
    %c0_13 = arith.constant 0 : index
    %c0_14 = arith.constant 0 : index
    %24 = vector.load %arg4[%c1, %c0_13, %c0_14] : memref<4x8x128xf32, #tpu.memory_space<vmem>>, vector<1x8x128xf32>
    %25 = vector.shape_cast %24 : vector<1x8x128xf32> to vector<8x128xf32>
    %cst_15 = arith.constant dense<0.000000e+00> : vector<16x128xf32>
    %26 = tpu.matmul %23, %25, %cst_15 {dimension_numbers = #tpu.dot_dimension_numbers<[1], [0], [0], [1], [0, 0, 1, 1], [], []>} : vector<16x8xf32>, vector<8x128xf32>, vector<16x128xf32> -> vector<16x128xf32>
    %27 = arith.addf %22, %26 : vector<16x128xf32>
    %28 = vector.extract_strided_slice %16 {offsets = [32, 0], sizes = [16, 8], strides = [1, 1]} : vector<64x8xf32> to vector<16x8xf32>
    %c2 = arith.constant 2 : index
    %c0_16 = arith.constant 0 : index
    %c0_17 = arith.constant 0 : index
    %29 = vector.load %arg4[%c2, %c0_16, %c0_17] : memref<4x8x128xf32, #tpu.memory_space<vmem>>, vector<1x8x128xf32>
    %30 = vector.shape_cast %29 : vector<1x8x128xf32> to vector<8x128xf32>
    %cst_18 = arith.constant dense<0.000000e+00> : vector<16x128xf32>
    %31 = tpu.matmul %28, %30, %cst_18 {dimension_numbers = #tpu.dot_dimension_numbers<[1], [0], [0], [1], [0, 0, 1, 1], [], []>} : vector<16x8xf32>, vector<8x128xf32>, vector<16x128xf32> -> vector<16x128xf32>
    %32 = arith.addf %27, %31 : vector<16x128xf32>
    %33 = vector.extract_strided_slice %16 {offsets = [48, 0], sizes = [16, 8], strides = [1, 1]} : vector<64x8xf32> to vector<16x8xf32>
    %c3 = arith.constant 3 : index
    %c0_19 = arith.constant 0 : index
    %c0_20 = arith.constant 0 : index
    %34 = vector.load %arg4[%c3, %c0_19, %c0_20] : memref<4x8x128xf32, #tpu.memory_space<vmem>>, vector<1x8x128xf32>
    %35 = vector.shape_cast %34 : vector<1x8x128xf32> to vector<8x128xf32>
    %cst_21 = arith.constant dense<0.000000e+00> : vector<16x128xf32>
    %36 = tpu.matmul %33, %35, %cst_21 {dimension_numbers = #tpu.dot_dimension_numbers<[1], [0], [0], [1], [0, 0, 1, 1], [], []>} : vector<16x8xf32>, vector<8x128xf32>, vector<16x128xf32> -> vector<16x128xf32>
    %37 = arith.addf %32, %36 : vector<16x128xf32>
    %c0_22 = arith.constant 0 : index
    %c0_23 = arith.constant 0 : index
    %38 = vector.load %arg6[%c0_22, %c0_23] : memref<16x128xf32, #tpu.memory_space<vmem>>, vector<16x128xf32>
    tpu.vector_store %arg6[%c0_22, %c0_23], %37 {strides = array<i32>} : memref<16x128xf32, #tpu.memory_space<vmem>>, vector<16x128xf32>,
    return
  }
  func.func @transform_0(%arg0: i32) -> (i32, i32) {
    %c0_i32 = arith.constant 0 : i32
    %c0_i32_0 = arith.constant 0 : i32
    return %arg0, %c0_i32 : i32, i32
  }
  func.func @transform_1(%arg0: i32) -> (i32, i32) {
    %c0_i32 = arith.constant 0 : i32
    %c0_i32_0 = arith.constant 0 : i32
    %c0_i32_1 = arith.constant 0 : i32
    return %c0_i32, %c0_i32_0 : i32, i32
  }
  func.func @transform_2(%arg0: i32) -> (i32, i32) {
    %c0_i32 = arith.constant 0 : i32
    %c0_i32_0 = arith.constant 0 : i32
    %c0_i32_1 = arith.constant 0 : i32
    return %c0_i32, %c0_i32_0 : i32, i32
  }
  func.func @transform_3(%arg0: i32) -> (i32, i32, i32) {
    %c0_i32 = arith.constant 0 : i32
    %c0_i32_0 = arith.constant 0 : i32
    %c0_i32_1 = arith.constant 0 : i32
    %c0_i32_2 = arith.constant 0 : i32
    return %c0_i32, %c0_i32_0, %c0_i32_1 : i32, i32, i32
  }
  func.func @transform_4(%arg0: i32) -> (i32, i32) {
    %c0_i32 = arith.constant 0 : i32
    %c0_i32_0 = arith.constant 0 : i32
    %c0_i32_1 = arith.constant 0 : i32
    return %c0_i32, %c0_i32_0 : i32, i32
  }
  func.func @transform_5(%arg0: i32) -> (i32, i32) {
    %c0_i32 = arith.constant 0 : i32
    %c0_i32_0 = arith.constant 0 : i32
    return %arg0, %c0_i32 : i32, i32
  }
}

</mosaic_0001>

<llo_original>
// kernel: tile.9
$region0: #{tile.9}
  %s0 = inlined_call_operand.vmem [shape: f32[9,4,32], index: 0, kind: input, shape index: {}]
  %s1 = inlined_call_operand.vmem [shape: f32[9,128], index: 1, kind: output, shape index: {}]
  $region1: #{tile.9} parent=0
    #allocation0 [shape = 'u8[36864]{0}', space=vmem, size = 0x9000, scoped, tag = 'scoped mem for input reshape']
    %s3 = sshll.u32 1, 4
    %s4 = ssub.s32 %s3, 1
    %s5 = smul.addr 4, 8
    %s6 = scalar_lea.vmem %s0, %s5
    %v7 = vld [vmem:[%s6] sm:%s4]
    %s8 = scalar_lea.vmem [#allocation0], 64
    %9 = vst [vmem:[%s8] sm:%s4] %v7
    %s10 = smul.addr 4, 7
    %s11 = scalar_lea.vmem %s0, %s10
    %v12 = vld [vmem:[%s11] sm:%s4]
    %s13 = scalar_lea.vmem [#allocation0], 56
    %14 = vst [vmem:[%s13] sm:%s4] %v12
    %s15 = smul.addr 4, 6
    %s16 = scalar_lea.vmem %s0, %s15
    %v17 = vld [vmem:[%s16] sm:%s4]
    %s18 = scalar_lea.vmem [#allocation0], 48
    %19 = vst [vmem:[%s18] sm:%s4] %v17
    %s20 = smul.addr 4, 5
    %s21 = scalar_lea.vmem %s0, %s20
    %v22 = vld [vmem:[%s21] sm:%s4]
    %s23 = scalar_lea.vmem [#allocation0], 40
    %24 = vst [vmem:[%s23] sm:%s4] %v22
    %s25 = smul.addr 4, 4
    %s26 = scalar_lea.vmem %s0, %s25
    %v27 = vld [vmem:[%s26] sm:%s4]
    %s28 = scalar_lea.vmem [#allocation0], 32
    %29 = vst [vmem:[%s28] sm:%s4] %v27
    %s30 = smul.addr 4, 3
    %s31 = scalar_lea.vmem %s0, %s30
    %v32 = vld [vmem:[%s31] sm:%s4]
    %s33 = scalar_lea.vmem [#allocation0], 24
    %34 = vst [vmem:[%s33] sm:%s4] %v32
    %s35 = smul.addr 4, 2
    %s36 = scalar_lea.vmem %s0, %s35
    %v37 = vld [vmem:[%s36] sm:%s4]
    %s38 = scalar_lea.vmem [#allocation0], 16
    %39 = vst [vmem:[%s38] sm:%s4] %v37
    %s40 = scalar_lea.vmem %s0, 4
    %v41 = vld [vmem:[%s40] sm:%s4]
    %s42 = scalar_lea.vmem [#allocation0], 8
    %43 = vst [vmem:[%s42] sm:%s4] %v41
    %v44 = vld [vmem:[%s0] sm:%s4]
    %45 = vst [vmem:[#allocation0] sm:%s4] %v44
    %v46 = vld [vmem:[#allocation0] ss:$8 sm:$0xf]
    %v47 = vld [vmem:[#allocation0] ss:$8 sm:$0xf0]
    %vm48 = vcmask 1047556
    %v49 = vsel %vm48, %v47, %v46
    %vm50 = vcmask 261120
    %51 = vst.msk [vmem:[%s1] sm:$0xff] %vm50, %v49
    %s52 = scalar_lea.vmem [#allocation0], 64
    %v53 = vld [vmem:[%s52] sm:$0x1]
    %vm54 = vcmask 261120
    %s55 = scalar_lea.vmem %s1, 8
    %56 = vst.msk [vmem:[%s55] sm:$0x1] %vm54, %v53
    %s57 = scalar_lea.vmem [#allocation0], 3
    %v58 = vld [vmem:[%s57] ss:$8 sm:$0xf]
    %s59 = scalar_lea.vmem [#allocation0], 3
    %v60 = vld [vmem:[%s59] ss:$8 sm:$0xf0]
    %vm61 = vcmask 1047556
    %v62 = vsel %vm61, %v60, %v58
    %63 = vrot.lane.b32.xlu0 %v62, 96
    %v64 = vpop.permute.xlu0 %63
    %vm65 = vcmask 1048320
    %66 = vst.msk [vmem:[%s1] sm:$0xff] %vm65, %v64
    %s67 = scalar_lea.vmem [#allocation0], 67
    %v68 = vld [vmem:[%s67] sm:$0x1]
    %69 = vrot.lane.b32.xlu0 %v68, 96
    %v70 = vpop.permute.xlu0 %69
    %vm71 = vcmask 1048320
    %s72 = scalar_lea.vmem %s1, 8
    %73 = vst.msk [vmem:[%s72] sm:$0x1] %vm71, %v70
    %s74 = scalar_lea.vmem [#allocation0], 2
    %v75 = vld [vmem:[%s74] ss:$8 sm:$0xf]
    %s76 = scalar_lea.vmem [#allocation0], 2
    %v77 = vld [vmem:[%s76] ss:$8 sm:$0xf0]
    %vm78 = vcmask 1047556
    %v79 = vsel %vm78, %v77, %v75
    %80 = vrot.lane.b32.xlu0 %v79, 64
    %v81 = vpop.permute.xlu0 %80
    %vm82 = vcmask 785920
    %83 = vst.msk [vmem:[%s1] sm:$0xff] %vm82, %v81
    %s84 = scalar_lea.vmem [#allocation0], 66
    %v85 = vld [vmem:[%s84] sm:$0x1]
    %86 = vrot.lane.b32.xlu0 %v85, 64
    %v87 = vpop.permute.xlu0 %86
    %vm88 = vcmask 785920
    %s89 = scalar_lea.vmem %s1, 8
    %90 = vst.msk [vmem:[%s89] sm:$0x1] %vm88, %v87
    %s91 = scalar_lea.vmem [#allocation0], 1
    %v92 = vld [vmem:[%s91] ss:$8 sm:$0xf]
    %s93 = scalar_lea.vmem [#allocation0], 1
    %v94 = vld [vmem:[%s93] ss:$8 sm:$0xf0]
    %vm95 = vcmask 1047556
    %v96 = vsel %vm95, %v94, %v92
    %97 = vrot.lane.b32.xlu0 %v96, 32
    %v98 = vpop.permute.xlu0 %97
    %vm99 = vcmask 523520
    %100 = vst.msk [vmem:[%s1] sm:$0xff] %vm99, %v98
    %s101 = scalar_lea.vmem [#allocation0], 65
    %v102 = vld [vmem:[%s101] sm:$0x1]
    %103 = vrot.lane.b32.xlu0 %v102, 32
    %v104 = vpop.permute.xlu0 %103
    %vm105 = vcmask 523520
    %s106 = scalar_lea.vmem %s1, 8
    %107 = vst.msk [vmem:[%s106] sm:$0x1] %vm105, %v104

// kernel: efficient_vit_transformer.1
$region0: #{efficient_vit_transformer.1}
  #allocation0 [shape = 'u32[]', space=smem, size = 0x4, offset = 0x4, fixed_abs, tag = 'smem constant byte address 0x4 - core index']
  #allocation1 [shape = 'u32[144,128]{1,0:T(1,128)}', space=vmem, size = 0x12000, scoped, tag = 'internal scratch']
  %s0 = inlined_call_operand.vmem [shape: f32[512,4], index: 0, kind: input, shape index: {}]
  %s1 = inlined_call_operand.vmem [shape: f32[4,8], index: 1, kind: input, shape index: {}]
  %s2 = inlined_call_operand.vmem [shape: f32[1,8], index: 2, kind: input, shape index: {}]
  %s3 = inlined_call_operand.vmem [shape: f32[4,8,128], index: 3, kind: input, shape index: {}]
  %s4 = inlined_call_operand.vmem [shape: f32[16,128], index: 4, kind: input, shape index: {}]
  %s5 = inlined_call_operand.vmem [shape: f32[32,128], index: 5, kind: output, shape index: {}]
  %s6 = sld [smem:[#allocation0]]
  $region53: #{efficient_vit_transformer.1} parent=0
    _
  %s8 = ssub.s32 1, %s6
  %s9 = scalar_select 0, %s8, %s6
  loop: start=0, step=1, limit=4
  $region2: #{efficient_vit_transformer.1} parent=0 // loop_pre_header
    _
  $region3: #{efficient_vit_transformer.1} parent=0 // loop_header
    %s11 = sphi 0, %s15
    %p12 = scmp.ge.s32.totalorder %s11, 4
    %s21 = sphi 0, %s23
    %s24 = sphi 0, %s21
    %s25 = sphi 0, %s24
    %s41 = sphi 0, %s25
    %s45 = sphi 0, %s45
    %s47 = sphi 0, %s45
    %s48 = sphi 0, %s47
    %s62 = sphi 0, %s48
    %s66 = sphi 0, %s66
    %s68 = sphi 0, %s66
    %s69 = sphi 0, %s68
    %s83 = sphi 0, %s69
    %s87 = sphi 0, %s87
    %s89 = sphi 0, %s87
    %s90 = sphi 0, %s89
    %s104 = sphi 0, %s90
    %s108 = sphi 0, %s108
    %s110 = sphi 0, %s108
    %s111 = sphi 0, %s110
    %s125 = sphi 0, %s111
    %s131 = sphi 0, %s133
    %s134 = sphi 0, %s131
    %s135 = sphi 0, %s134
    %s151 = sphi 0, %s135
  $region4: #{efficient_vit_transformer.1} parent=0 // loop_header_branch
    %14 = sbr.rel (%p12) target = $region8
  $region5: #{efficient_vit_transformer.1} parent=0 // loop_body
    %s16 = ssub.s32 %s11, 1
    %s17 = ssub.s32 %s11, 2
    %s18 = sadd.s32 %s11, 1
    %s19 = ssub.s32 %s11, %s18
    %p20 = scmp.eq.s32.totalorder %s19, 0
    %s22 = sadd.s32 %s21, 1
    %s23 = scalar_select %p20, %s21, %s22
    %p26 = pneg %p20
    %p27 = scmp.eq.s32.totalorder %s11, 1
    %p28 = por %p26, %p27
    %p29 = scmp.ne.s32.totalorder %s21, %s24
    %p30 = scmp.eq.s32.totalorder %s11, 0
    %p31 = por %p29, %p30
    %p32 = scmp.ne.s32.totalorder %s21, %s24
    %p33 = scmp.eq.s32.totalorder %s16, 1
    %p34 = por %p32, %p33
    %p35 = scmp.ne.s32.totalorder %s24, %s25
    %p36 = scmp.eq.s32.totalorder %s16, 0
    %p37 = por %p35, %p36
    %p38 = scmp.ne.s32.totalorder %s24, %s25
    %p39 = scmp.eq.s32.totalorder %s17, 1
    %p40 = por %p38, %p39
    %p42 = scmp.ne.s32.totalorder %s25, %s41
    %p43 = scmp.eq.s32.totalorder %s17, 0
    %p44 = por %p42, %p43
    %s46 = sadd.s32 %s45, 1
    %p49 = scmp.eq.s32.totalorder %s11, 1
    %p50 = scmp.ne.s32.totalorder %s45, %s47
    %p51 = scmp.eq.s32.totalorder %s11, 0
    %p52 = por %p50, %p51
    %p53 = scmp.ne.s32.totalorder %s45, %s47
    %p54 = scmp.eq.s32.totalorder %s16, 1
    %p55 = por %p53, %p54
    %p56 = scmp.ne.s32.totalorder %s47, %s48
    %p57 = scmp.eq.s32.totalorder %s16, 0
    %p58 = por %p56, %p57
    %p59 = scmp.ne.s32.totalorder %s47, %s48
    %p60 = scmp.eq.s32.totalorder %s17, 1
    %p61 = por %p59, %p60
    %p63 = scmp.ne.s32.totalorder %s48, %s62
    %p64 = scmp.eq.s32.totalorder %s17, 0
    %p65 = por %p63, %p64
    %s67 = sadd.s32 %s66, 1
    %p70 = scmp.eq.s32.totalorder %s11, 1
    %p71 = scmp.ne.s32.totalorder %s66, %s68
    %p72 = scmp.eq.s32.totalorder %s11, 0
    %p73 = por %p71, %p72
    %p74 = scmp.ne.s32.totalorder %s66, %s68
    %p75 = scmp.eq.s32.totalorder %s16, 1
    %p76 = por %p74, %p75
    %p77 = scmp.ne.s32.totalorder %s68, %s69
    %p78 = scmp.eq.s32.totalorder %s16, 0
    %p79 = por %p77, %p78
    %p80 = scmp.ne.s32.totalorder %s68, %s69
    %p81 = scmp.eq.s32.totalorder %s17, 1
    %p82 = por %p80, %p81
    %p84 = scmp.ne.s32.totalorder %s69, %s83
    %p85 = scmp.eq.s32.totalorder %s17, 0
    %p86 = por %p84, %p85
    %s88 = sadd.s32 %s87, 1
    %p91 = scmp.eq.s32.totalorder %s11, 1
    %p92 = scmp.ne.s32.totalorder %s87, %s89
    %p93 = scmp.eq.s32.totalorder %s11, 0
    %p94 = por %p92, %p93
    %p95 = scmp.ne.s32.totalorder %s87, %s89
    %p96 = scmp.eq.s32.totalorder %s16, 1
    %p97 = por %p95, %p96
    %p98 = scmp.ne.s32.totalorder %s89, %s90
    %p99 = scmp.eq.s32.totalorder %s16, 0
    %p100 = por %p98, %p99
    %p101 = scmp.ne.s32.totalorder %s89, %s90
    %p102 = scmp.eq.s32.totalorder %s17, 1
    %p103 = por %p101, %p102
    %p105 = scmp.ne.s32.totalorder %s90, %s104
    %p106 = scmp.eq.s32.totalorder %s17, 0
    %p107 = por %p105, %p106
    %s109 = sadd.s32 %s108, 1
    %p112 = scmp.eq.s32.totalorder %s11, 1
    %p113 = scmp.ne.s32.totalorder %s108, %s110
    %p114 = scmp.eq.s32.totalorder %s11, 0
    %p115 = por %p113, %p114
    %p116 = scmp.ne.s32.totalorder %s108, %s110
    %p117 = scmp.eq.s32.totalorder %s16, 1
    %p118 = por %p116, %p117
    %p119 = scmp.ne.s32.totalorder %s110, %s111
    %p120 = scmp.eq.s32.totalorder %s16, 0
    %p121 = por %p119, %p120
    %p122 = scmp.ne.s32.totalorder %s110, %s111
    %p123 = scmp.eq.s32.totalorder %s17, 1
    %p124 = por %p122, %p123
    %p126 = scmp.ne.s32.totalorder %s111, %s125
    %p127 = scmp.eq.s32.totalorder %s17, 0
    %p128 = por %p126, %p127
    %s129 = ssub.s32 %s11, %s18
    %p130 = scmp.eq.s32.totalorder %s129, 0
    %s132 = sadd.s32 %s131, 1
    %s133 = scalar_select %p130, %s131, %s132
    %p136 = pneg %p130
    %p137 = scmp.eq.s32.totalorder %s11, 1
    %p138 = por %p136, %p137
    %p139 = scmp.ne.s32.totalorder %s131, %s134
    %p140 = scmp.eq.s32.totalorder %s11, 0
    %p141 = por %p139, %p140
    %p142 = scmp.ne.s32.totalorder %s131, %s134
    %p143 = scmp.eq.s32.totalorder %s16, 1
    %p144 = por %p142, %p143
    %p145 = scmp.ne.s32.totalorder %s134, %s135
    %p146 = scmp.eq.s32.totalorder %s16, 0
    %p147 = por %p145, %p146
    %p148 = scmp.ne.s32.totalorder %s134, %s135
    %p149 = scmp.eq.s32.totalorder %s17, 1
    %p150 = por %p148, %p149
    %p152 = scmp.ne.s32.totalorder %s135, %s151
    %p153 = scmp.eq.s32.totalorder %s17, 0
    %p154 = por %p152, %p153
    %p155 = scmp.le.s32.totalorder 1, %s11
    %p156 = scmp.lt.s32.totalorder %s11, 3
    %p157 = pnand %p155, %p156
    %p158 = pneg %p157
    // Predicated region
    $region9: #{efficient_vit_transformer.1} parent=5 // pred_check
      _
    $region10: #{efficient_vit_transformer.1} parent=5 // pred_check_branch
      %160 = sbr.rel (%p157) target = $region12
    $region11: #{efficient_vit_transformer.1} parent=5 // pred_region
      %s161 = ssub.s32 %s11, 1
      // Predicated region
      $region13: #{efficient_vit_transformer.1} parent=11 // pred_check
        %p162 = pneg %p58
      $region14: #{efficient_vit_transformer.1} parent=11 // pred_check_branch
        %164 = sbr.rel (%p162) target = $region16
      $region15: #{efficient_vit_transformer.1} parent=11 // pred_region
        _
      $region16: #{efficient_vit_transformer.1} parent=11 // pred_fallthru
        _
      // Predicated region
      $region17: #{efficient_vit_transformer.1} parent=11 // pred_check
        %p165 = pneg %p79
      $region18: #{efficient_vit_transformer.1} parent=11 // pred_check_branch
        %167 = sbr.rel (%p165) target = $region20
      $region19: #{efficient_vit_transformer.1} parent=11 // pred_region
        _
      $region20: #{efficient_vit_transformer.1} parent=11 // pred_fallthru
        _
      // Predicated region
      $region21: #{efficient_vit_transformer.1} parent=11 // pred_check
        %p168 = pneg %p100
      $region22: #{efficient_vit_transformer.1} parent=11 // pred_check_branch
        %170 = sbr.rel (%p168) target = $region24
      $region23: #{efficient_vit_transformer.1} parent=11 // pred_region
        _
      $region24: #{efficient_vit_transformer.1} parent=11 // pred_fallthru
        _
      // Predicated region
      $region25: #{efficient_vit_transformer.1} parent=11 // pred_check
        %p171 = pneg %p121
      $region26: #{efficient_vit_transformer.1} parent=11 // pred_check_branch
        %173 = sbr.rel (%p171) target = $region28
      $region27: #{efficient_vit_transformer.1} parent=11 // pred_region
        _
      $region28: #{efficient_vit_transformer.1} parent=11 // pred_fallthru
        _
    $region12: #{efficient_vit_transformer.1} parent=5 // pred_fallthru
      _
    %p174 = scmp.lt.s32.totalorder %s11, 2
    // Predicated region
    $region29: #{efficient_vit_transformer.1} parent=5 // pred_check
      %p175 = pneg %p174
    $region30: #{efficient_vit_transformer.1} parent=5 // pred_check_branch
      %177 = sbr.rel (%p175) target = $region32
    $region31: #{efficient_vit_transformer.1} parent=5 // pred_region
      // Predicated region
      $region33: #{efficient_vit_transformer.1} parent=31 // pred_check
        %p178 = pneg %p31
      $region34: #{efficient_vit_transformer.1} parent=31 // pred_check_branch
        %180 = sbr.rel (%p178) target = $region36
      $region35: #{efficient_vit_transformer.1} parent=31 // pred_region
        %s181 = smul.u32 32, %s11
        %p182 = scmp.lt.s32.totalorder %s181, 63
        %s183 = scalar_select %p182, %s181, 63
        %s184 = smul.addr %s183, 8
        %s185 = scalar_lea.vmem %s0, %s184
        %s186 = smul.u32 32, %s11
      $region36: #{efficient_vit_transformer.1} parent=31 // pred_fallthru
        _
    $region32: #{efficient_vit_transformer.1} parent=5 // pred_fallthru
      _
    %p187 = scmp.le.s32.totalorder 1, %s11
    %p188 = scmp.lt.s32.totalorder %s11, 3
    %p189 = pnand %p187, %p188
    %p190 = pneg %p189
    // Predicated region
    $region37: #{efficient_vit_transformer.1} parent=5 // pred_check
      _
    $region38: #{efficient_vit_transformer.1} parent=5 // pred_check_branch
      %192 = sbr.rel (%p189) target = $region40
    $region39: #{efficient_vit_transformer.1} parent=5 // pred_region
      %s193 = ssub.s32 %s11, 1
      %s194 = smul.u32 32, %s16
      %p195 = scmp.lt.s32.totalorder %s194, 63
      %s196 = scalar_select %p195, %s194, 63
      %s197 = smul.addr %s196, 8
      %s198 = scalar_lea.vmem %s0, %s197
      %p199 = pneg %p37
      %p200 = pneg %p34
      %p201 = pneg %p58
      %p202 = pneg %p55
      %p203 = pneg %p79
      %p204 = pneg %p76
      %p205 = pneg %p100
      %p206 = pneg %p97
      %p207 = pneg %p121
      %p208 = pneg %p118
      %p209 = pneg %p147
      %p210 = pneg %p144
      %s211 = smul.u32 2, %s16
      %p212 = scmp.lt.s32.totalorder %s211, 3
      %s213 = scalar_select %p212, %s211, 3
      %s214 = smul.addr %s213, 8
      %s215 = scalar_lea.vmem %s5, %s214
      %s216 = smul.u32 32, %s16
      %p217 = scmp.lt.s32.totalorder %s216, 63
      %s218 = scalar_select %p217, %s216, 63
      %s219 = smul.addr %s218, 8
      %s220 = scalar_lea.vmem %s0, %s219
      %s221 = smul.u32 32, %s16
      %s222 = smul.u32 2, %s16
      %p223 = scmp.lt.s32.totalorder %s222, 3
      %s224 = scalar_select %p223, %s222, 3
      %s225 = smul.addr %s224, 8
      %s226 = scalar_lea.vmem %s5, %s225
      %s227 = smul.u32 2, %s16
      %v228 = vld [vmem:[%s220] sm:$0xff]
      %v229 = vld [vmem:[%s220 + $0x8] sm:$0xff]
      %v230 = vld [vmem:[%s220 + $0x10] sm:$0xff]
      %v231 = vld [vmem:[%s220 + $0x18] sm:$0xff]
      %v232 = vld [vmem:[%s220 + $0x20] sm:$0xff]
      %v233 = vld [vmem:[%s220 + $0x28] sm:$0xff]
      %v234 = vld [vmem:[%s220 + $0x30] sm:$0xff]
      %v235 = vld [vmem:[%s220 + $0x38] sm:$0xff]
      %v236 = vld [vmem:[%s220 + $0x40] sm:$0xff]
      %v237 = vld [vmem:[%s220 + $0x48] sm:$0xff]
      %v238 = vld [vmem:[%s220 + $0x50] sm:$0xff]
      %v239 = vld [vmem:[%s220 + $0x58] sm:$0xff]
      %v240 = vld [vmem:[%s220 + $0x60] sm:$0xff]
      %v241 = vld [vmem:[%s220 + $0x68] sm:$0xff]
      %v242 = vld [vmem:[%s220 + $0x70] sm:$0xff]
      %v243 = vld [vmem:[%s220 + $0x78] sm:$0xff]
      %v244 = vld [vmem:[%s220 + $0x80] sm:$0xff]
      %v245 = vld [vmem:[%s220 + $0x88] sm:$0xff]
      %v246 = vld [vmem:[%s220 + $0x90] sm:$0xff]
      %v247 = vld [vmem:[%s220 + $0x98] sm:$0xff]
      %v248 = vld [vmem:[%s220 + $0xa0] sm:$0xff]
      %v249 = vld [vmem:[%s220 + $0xa8] sm:$0xff]
      %v250 = vld [vmem:[%s220 + $0xb0] sm:$0xff]
      %v251 = vld [vmem:[%s220 + $0xb8] sm:$0xff]
      %v252 = vld [vmem:[%s220 + $0xc0] sm:$0xff]
      %v253 = vld [vmem:[%s220 + $0xc8] sm:$0xff]
      %v254 = vld [vmem:[%s220 + $0xd0] sm:$0xff]
      %v255 = vld [vmem:[%s220 + $0xd8] sm:$0xff]
      %v256 = vld [vmem:[%s220 + $0xe0] sm:$0xff]
      %v257 = vld [vmem:[%s220 + $0xe8] sm:$0xff]
      %v258 = vld [vmem:[%s220 + $0xf0] sm:$0xff]
      %v259 = vld [vmem:[%s220 + $0xf8] sm:$0xff]
      %v260 = vld [vmem:[%s1] sm:$0xf]
      %v261 = vld [vmem:[%s2] sm:$0x1]
      %v263 = vlaneseq
      %v264 = vshrl.u32 %v263, 7
      %v265 = vsub.s32 0, %v264
      %v266 = vrot.slane %v261, %v265
      %vm268 = vcmask 31744
      %v270 = vsel %vm268, %v228, 0
      %v273 = vsel %vm268, %v229, 0
      %v276 = vsel %vm268, %v230, 0
      %v279 = vsel %vm268, %v231, 0
      %v282 = vsel %vm268, %v232, 0
      %v285 = vsel %vm268, %v233, 0
      %v288 = vsel %vm268, %v234, 0
      %v291 = vsel %vm268, %v235, 0
      %v294 = vsel %vm268, %v236, 0
      %v297 = vsel %vm268, %v237, 0
      %v300 = vsel %vm268, %v238, 0
      %v303 = vsel %vm268, %v239, 0
      %v306 = vsel %vm268, %v240, 0
      %v309 = vsel %vm268, %v241, 0
      %v312 = vsel %vm268, %v242, 0
      %v315 = vsel %vm268, %v243, 0
      %v318 = vsel %vm268, %v244, 0
      %v321 = vsel %vm268, %v245, 0
      %v324 = vsel %vm268, %v246, 0
      %v327 = vsel %vm268, %v247, 0
      %v330 = vsel %vm268, %v248, 0
      %v333 = vsel %vm268, %v249, 0
      %v336 = vsel %vm268, %v250, 0
      %v339 = vsel %vm268, %v251, 0
      %v342 = vsel %vm268, %v252, 0
      %v345 = vsel %vm268, %v253, 0
      %v348 = vsel %vm268, %v254, 0
      %v351 = vsel %vm268, %v255, 0
      %v354 = vsel %vm268, %v256, 0
      %v357 = vsel %vm268, %v257, 0
      %v360 = vsel %vm268, %v258, 0
      %v363 = vsel %vm268, %v259, 0
      %vm365 = vcmask 1043456
      %v367 = vsel %vm365, %v260, 0
      %369 = vmatprep.subr.mxu0 0.0
      %370 = vmatpush1.msra.mxu0 0.0
      %371 = vmatprep.subr.mxu0 0.0
      %372 = vmatpush1.msra.mxu0 0.0
      %373 = vmatprep.subr.mxu0 0.0
      %374 = vmatpush1.msra.mxu0 0.0
      %375 = vmatprep.subr.mxu0 0.0
      %376 = vmatpush1.msra.mxu0 0.0
      %377 = vmatprep.subr.mxu0 0.0
      %378 = vmatpush1.msra.mxu0 0.0
      %379 = vmatprep.subr.mxu0 0.0
      %380 = vmatpush1.msra.mxu0 0.0
      %381 = vmatprep.subr.mxu0 0.0
      %382 = vmatpush1.msra.mxu0 0.0
      %383 = vmatprep.subr.mxu0 0.0
      %384 = vmatpush1.msra.mxu0 0.0
      %385 = vmatprep.subr.mxu0 0.0
      %386 = vmatpush1.msra.mxu0 0.0
      %387 = vmatprep.subr.mxu0 0.0
      %388 = vmatpush1.msra.mxu0 0.0
      %389 = vmatprep.subr.mxu0 0.0
      %390 = vmatpush1.msra.mxu0 0.0
      %391 = vmatprep.subr.mxu0 0.0
      %392 = vmatpush1.msra.mxu0 0.0
      %393 = vmatprep.subr.mxu0 0.0
      %394 = vmatpush1.msra.mxu0 0.0
      %395 = vmatprep.subr.mxu0 0.0
      %396 = vmatpush1.msra.mxu0 0.0
      %397 = vmatprep.subr.mxu0 0.0
      %398 = vmatpush1.msra.mxu0 0.0
      %399 = vmatprep.subr.mxu0 0.0
      %400 = vmatpush1.msra.mxu0 %v367
      %401 = vmatprep.subr.mxu0 0.0
      %402 = vmatpush2.msra.mxu0 0.0
      %403 = vmatprep.subr.mxu0 0.0
      %404 = vmatpush2.msra.mxu0 0.0
      %405 = vmatprep.subr.mxu0 0.0
      %406 = vmatpush2.msra.mxu0 0.0
      %407 = vmatprep.subr.mxu0 0.0
      %408 = vmatpush2.msra.mxu0 0.0
      %409 = vmatprep.subr.mxu0 0.0
      %410 = vmatpush2.msra.mxu0 0.0
      %411 = vmatprep.subr.mxu0 0.0
      %412 = vmatpush2.msra.mxu0 0.0
      %413 = vmatprep.subr.mxu0 0.0
      %414 = vmatpush2.msra.mxu0 0.0
      %415 = vmatprep.subr.mxu0 0.0
      %416 = vmatpush2.msra.mxu0 0.0
      %417 = vmatprep.subr.mxu0 0.0
      %418 = vmatpush2.msra.mxu0 0.0
      %419 = vmatprep.subr.mxu0 0.0
      %420 = vmatpush2.msra.mxu0 0.0
      %421 = vmatprep.subr.mxu0 0.0
      %422 = vmatpush2.msra.mxu0 0.0
      %423 = vmatprep.subr.mxu0 0.0
      %424 = vmatpush2.msra.mxu0 0.0
      %425 = vmatprep.subr.mxu0 0.0
      %426 = vmatpush2.msra.mxu0 0.0
      %427 = vmatprep.subr.mxu0 0.0
      %428 = vmatpush2.msra.mxu0 0.0
      %429 = vmatprep.subr.mxu0 0.0
      %430 = vmatpush2.msra.mxu0 0.0
      %431 = vmatprep.subr.mxu0 0.0
      %432 = vmatpush2.msra.mxu0 0.0
      %433 = vmatprep.mubr.f32.mxu0 0.0
      %434 = vmatmul.mubr.f32.gmra.mxu0 %v270
      %v435 = vpop.f32.mrf.mxu0
      %v436 = vadd.f32 %v266, %v435
      %v437 = vpop.f32.mrf.mxu0
      %438 = vmatprep.mubr.f32.mxu0 0.0
      %439 = vmatmul.mubr.f32.gmra.mxu0 %v273
      %v440 = vpop.f32.mrf.mxu0
      %v441 = vadd.f32 %v266, %v440
      %v442 = vpop.f32.mrf.mxu0
      %443 = vmatprep.mubr.f32.mxu0 0.0
      %444 = vmatmul.mubr.f32.gmra.mxu0 %v276
      %v445 = vpop.f32.mrf.mxu0
      %v446 = vadd.f32 %v266, %v445
      %v447 = vpop.f32.mrf.mxu0
      %448 = vmatprep.mubr.f32.mxu0 0.0
      %449 = vmatmul.mubr.f32.gmra.mxu0 %v279
      %v450 = vpop.f32.mrf.mxu0
      %v451 = vadd.f32 %v266, %v450
      %v452 = vpop.f32.mrf.mxu0
      %453 = vmatprep.mubr.f32.mxu0 0.0
      %454 = vmatmul.mubr.f32.gmra.mxu0 %v282
      %v455 = vpop.f32.mrf.mxu0
      %v456 = vadd.f32 %v266, %v455
      %v457 = vpop.f32.mrf.mxu0
      %458 = vmatprep.mubr.f32.mxu0 0.0
      %459 = vmatmul.mubr.f32.gmra.mxu0 %v285
      %v460 = vpop.f32.mrf.mxu0
      %v461 = vadd.f32 %v266, %v460
      %v462 = vpop.f32.mrf.mxu0
      %463 = vmatprep.mubr.f32.mxu0 0.0
      %464 = vmatmul.mubr.f32.gmra.mxu0 %v288
      %v465 = vpop.f32.mrf.mxu0
      %v466 = vadd.f32 %v266, %v465
      %v467 = vpop.f32.mrf.mxu0
      %468 = vmatprep.mubr.f32.mxu0 0.0
      %469 = vmatmul.mubr.f32.gmra.mxu0 %v291
      %v470 = vpop.f32.mrf.mxu0
      %v471 = vadd.f32 %v266, %v470
      %v472 = vpop.f32.mrf.mxu0
      %473 = vmatprep.mubr.f32.mxu0 0.0
      %474 = vmatmul.mubr.f32.gmra.mxu0 %v294
      %v475 = vpop.f32.mrf.mxu0
      %v476 = vadd.f32 %v266, %v475
      %v477 = vpop.f32.mrf.mxu0
      %478 = vmatprep.mubr.f32.mxu0 0.0
      %479 = vmatmul.mubr.f32.gmra.mxu0 %v297
      %v480 = vpop.f32.mrf.mxu0
      %v481 = vadd.f32 %v266, %v480
      %v482 = vpop.f32.mrf.mxu0
      %483 = vmatprep.mubr.f32.mxu0 0.0
      %484 = vmatmul.mubr.f32.gmra.mxu0 %v300
      %v485 = vpop.f32.mrf.mxu0
      %v486 = vadd.f32 %v266, %v485
      %v487 = vpop.f32.mrf.mxu0
      %488 = vmatprep.mubr.f32.mxu0 0.0
      %489 = vmatmul.mubr.f32.gmra.mxu0 %v303
      %v490 = vpop.f32.mrf.mxu0
      %v491 = vadd.f32 %v266, %v490
      %v492 = vpop.f32.mrf.mxu0
      %493 = vmatprep.mubr.f32.mxu0 0.0
      %494 = vmatmul.mubr.f32.gmra.mxu0 %v306
      %v495 = vpop.f32.mrf.mxu0
      %v496 = vadd.f32 %v266, %v495
      %v497 = vpop.f32.mrf.mxu0
      %498 = vmatprep.mubr.f32.mxu0 0.0
      %499 = vmatmul.mubr.f32.gmra.mxu0 %v309
      %v500 = vpop.f32.mrf.mxu0
      %v501 = vadd.f32 %v266, %v500
      %v502 = vpop.f32.mrf.mxu0
      %503 = vmatprep.mubr.f32.mxu0 0.0
      %504 = vmatmul.mubr.f32.gmra.mxu0 %v312
      %v505 = vpop.f32.mrf.mxu0
      %v506 = vadd.f32 %v266, %v505
      %v507 = vpop.f32.mrf.mxu0
      %508 = vmatprep.mubr.f32.mxu0 0.0
      %509 = vmatmul.mubr.f32.gmra.mxu0 %v315
      %v510 = vpop.f32.mrf.mxu0
      %v511 = vadd.f32 %v266, %v510
      %v512 = vpop.f32.mrf.mxu0
      %513 = vmatprep.mubr.f32.mxu0 0.0
      %514 = vmatmul.mubr.f32.gmra.mxu0 %v318
      %v515 = vpop.f32.mrf.mxu0
      %v516 = vadd.f32 %v266, %v515
      %v517 = vpop.f32.mrf.mxu0
      %518 = vmatprep.mubr.f32.mxu0 0.0
      %519 = vmatmul.mubr.f32.gmra.mxu0 %v321
      %v520 = vpop.f32.mrf.mxu0
      %v521 = vadd.f32 %v266, %v520
      %v522 = vpop.f32.mrf.mxu0
      %523 = vmatprep.mubr.f32.mxu0 0.0
      %524 = vmatmul.mubr.f32.gmra.mxu0 %v324
      %v525 = vpop.f32.mrf.mxu0
      %v526 = vadd.f32 %v266, %v525
      %v527 = vpop.f32.mrf.mxu0
      %528 = vmatprep.mubr.f32.mxu0 0.0
      %529 = vmatmul.mubr.f32.gmra.mxu0 %v327
      %v530 = vpop.f32.mrf.mxu0
      %v531 = vadd.f32 %v266, %v530
      %v532 = vpop.f32.mrf.mxu0
      %533 = vmatprep.mubr.f32.mxu0 0.0
      %534 = vmatmul.mubr.f32.gmra.mxu0 %v330
      %v535 = vpop.f32.mrf.mxu0
      %v536 = vadd.f32 %v266, %v535
      %v537 = vpop.f32.mrf.mxu0
      %538 = vmatprep.mubr.f32.mxu0 0.0
      %539 = vmatmul.mubr.f32.gmra.mxu0 %v333
      %v540 = vpop.f32.mrf.mxu0
      %v541 = vadd.f32 %v266, %v540
      %v542 = vpop.f32.mrf.mxu0
      %543 = vmatprep.mubr.f32.mxu0 0.0
      %544 = vmatmul.mubr.f32.gmra.mxu0 %v336
      %v545 = vpop.f32.mrf.mxu0
      %v546 = vadd.f32 %v266, %v545
      %v547 = vpop.f32.mrf.mxu0
      %548 = vmatprep.mubr.f32.mxu0 0.0
      %549 = vmatmul.mubr.f32.gmra.mxu0 %v339
      %v550 = vpop.f32.mrf.mxu0
      %v551 = vadd.f32 %v266, %v550
      %v552 = vpop.f32.mrf.mxu0
      %553 = vmatprep.mubr.f32.mxu0 0.0
      %554 = vmatmul.mubr.f32.gmra.mxu0 %v342
      %v555 = vpop.f32.mrf.mxu0
      %v556 = vadd.f32 %v266, %v555
      %v557 = vpop.f32.mrf.mxu0
      %558 = vmatprep.mubr.f32.mxu0 0.0
      %559 = vmatmul.mubr.f32.gmra.mxu0 %v345
      %v560 = vpop.f32.mrf.mxu0
      %v561 = vadd.f32 %v266, %v560
      %v562 = vpop.f32.mrf.mxu0
      %563 = vmatprep.mubr.f32.mxu0 0.0
      %564 = vmatmul.mubr.f32.gmra.mxu0 %v348
      %v565 = vpop.f32.mrf.mxu0
      %v566 = vadd.f32 %v266, %v565
      %v567 = vpop.f32.mrf.mxu0
      %568 = vmatprep.mubr.f32.mxu0 0.0
      %569 = vmatmul.mubr.f32.gmra.mxu0 %v351
      %v570 = vpop.f32.mrf.mxu0
      %v571 = vadd.f32 %v266, %v570
      %v572 = vpop.f32.mrf.mxu0
      %573 = vmatprep.mubr.f32.mxu0 0.0
      %574 = vmatmul.mubr.f32.gmra.mxu0 %v354
      %v575 = vpop.f32.mrf.mxu0
      %v576 = vadd.f32 %v266, %v575
      %v577 = vpop.f32.mrf.mxu0
      %578 = vmatprep.mubr.f32.mxu0 0.0
      %579 = vmatmul.mubr.f32.gmra.mxu0 %v357
      %v580 = vpop.f32.mrf.mxu0
      %v581 = vadd.f32 %v266, %v580
      %v582 = vpop.f32.mrf.mxu0
      %583 = vmatprep.mubr.f32.mxu0 0.0
      %584 = vmatmul.mubr.f32.gmra.mxu0 %v360
      %v585 = vpop.f32.mrf.mxu0
      %v586 = vadd.f32 %v266, %v585
      %v587 = vpop.f32.mrf.mxu0
      %588 = vmatprep.mubr.f32.mxu0 0.0
      %589 = vmatmul.mubr.f32.gmra.mxu0 %v363
      %v590 = vpop.f32.mrf.mxu0
      %v591 = vadd.f32 %v266, %v590
      %v592 = vpop.f32.mrf.mxu0
      %593 = vdwg.mxu0
      %v594 = vmax.f32 %v436, 0.0
      %v595 = vmax.f32 %v441, 0.0
      %v596 = vmax.f32 %v446, 0.0
      %v597 = vmax.f32 %v451, 0.0
      %v598 = vmax.f32 %v456, 0.0
      %v599 = vmax.f32 %v461, 0.0
      %v600 = vmax.f32 %v466, 0.0
      %v601 = vmax.f32 %v471, 0.0
      %v602 = vmax.f32 %v476, 0.0
      %v603 = vmax.f32 %v481, 0.0
      %v604 = vmax.f32 %v486, 0.0
      %v605 = vmax.f32 %v491, 0.0
      %v606 = vmax.f32 %v496, 0.0
      %v607 = vmax.f32 %v501, 0.0
      %v608 = vmax.f32 %v506, 0.0
      %v609 = vmax.f32 %v511, 0.0
      %v610 = vmax.f32 %v516, 0.0
      %v611 = vmax.f32 %v521, 0.0
      %v612 = vmax.f32 %v526, 0.0
      %v613 = vmax.f32 %v531, 0.0
      %v614 = vmax.f32 %v536, 0.0
      %v615 = vmax.f32 %v541, 0.0
      %v616 = vmax.f32 %v546, 0.0
      %v617 = vmax.f32 %v551, 0.0
      %v618 = vmax.f32 %v556, 0.0
      %v619 = vmax.f32 %v561, 0.0
      %v620 = vmax.f32 %v566, 0.0
      %v621 = vmax.f32 %v571, 0.0
      %v622 = vmax.f32 %v576, 0.0
      %v623 = vmax.f32 %v581, 0.0
      %v624 = vmax.f32 %v586, 0.0
      %v625 = vmax.f32 %v591, 0.0
      %v626 = vadd.f32 %v594, %v602
      %v627 = vadd.f32 %v595, %v603
      %v628 = vadd.f32 %v596, %v604
      %v629 = vadd.f32 %v597, %v605
      %v630 = vadd.f32 %v598, %v606
      %v631 = vadd.f32 %v599, %v607
      %v632 = vadd.f32 %v600, %v608
      %v633 = vadd.f32 %v601, %v609
      %v634 = vadd.f32 %v626, %v610
      %v635 = vadd.f32 %v627, %v611
      %v636 = vadd.f32 %v628, %v612
      %v637 = vadd.f32 %v629, %v613
      %v638 = vadd.f32 %v630, %v614
      %v639 = vadd.f32 %v631, %v615
      %v640 = vadd.f32 %v632, %v616
      %v641 = vadd.f32 %v633, %v617
      %v642 = vadd.f32 %v634, %v618
      %v643 = vadd.f32 %v635, %v619
      %v644 = vadd.f32 %v636, %v620
      %v645 = vadd.f32 %v637, %v621
      %v646 = vadd.f32 %v638, %v622
      %v647 = vadd.f32 %v639, %v623
      %v648 = vadd.f32 %v640, %v624
      %v649 = vadd.f32 %v641, %v625
      %v650 = vmul.f32 %v642, 0.25
      %v651 = vmul.f32 %v643, 0.25
      %v652 = vmul.f32 %v644, 0.25
      %v653 = vmul.f32 %v645, 0.25
      %v654 = vmul.f32 %v646, 0.25
      %v655 = vmul.f32 %v647, 0.25
      %v656 = vmul.f32 %v648, 0.25
      %v657 = vmul.f32 %v649, 0.25
      %v658 = vld [vmem:[%s4] sm:$0xff]
      %v659 = vld [vmem:[%s4 + $0x8] sm:$0xff]
      %v660 = vld [vmem:[%s3] sm:$0xff]
      %vm661 = vcmask 64512
      %v663 = vsel %vm661, %v650, 0
      %v666 = vsel %vm661, %v651, 0
      %668 = vmatprep.subr.mxu0 0.0
      %669 = vmatpush1.msra.mxu0 0.0
      %670 = vmatprep.subr.mxu0 0.0
      %671 = vmatpush1.msra.mxu0 0.0
      %672 = vmatprep.subr.mxu0 0.0
      %673 = vmatpush1.msra.mxu0 0.0
      %674 = vmatprep.subr.mxu0 0.0
      %675 = vmatpush1.msra.mxu0 0.0
      %676 = vmatprep.subr.mxu0 0.0
      %677 = vmatpush1.msra.mxu0 0.0
      %678 = vmatprep.subr.mxu0 0.0
      %679 = vmatpush1.msra.mxu0 0.0
      %680 = vmatprep.subr.mxu0 0.0
      %681 = vmatpush1.msra.mxu0 0.0
      %682 = vmatprep.subr.mxu0 0.0
      %683 = vmatpush1.msra.mxu0 0.0
      %684 = vmatprep.subr.mxu0 0.0
      %685 = vmatpush1.msra.mxu0 0.0
      %686 = vmatprep.subr.mxu0 0.0
      %687 = vmatpush1.msra.mxu0 0.0
      %688 = vmatprep.subr.mxu0 0.0
      %689 = vmatpush1.msra.mxu0 0.0
      %690 = vmatprep.subr.mxu0 0.0
      %691 = vmatpush1.msra.mxu0 0.0
      %692 = vmatprep.subr.mxu0 0.0
      %693 = vmatpush1.msra.mxu0 0.0
      %694 = vmatprep.subr.mxu0 0.0
      %695 = vmatpush1.msra.mxu0 0.0
      %696 = vmatprep.subr.mxu0 0.0
      %697 = vmatpush1.msra.mxu0 0.0
      %698 = vmatprep.subr.mxu0 0.0
      %699 = vmatpush1.msra.mxu0 %v660
      %700 = vmatprep.subr.mxu0 0.0
      %701 = vmatpush2.msra.mxu0 0.0
      %702 = vmatprep.subr.mxu0 0.0
      %703 = vmatpush2.msra.mxu0 0.0
      %704 = vmatprep.subr.mxu0 0.0
      %705 = vmatpush2.msra.mxu0 0.0
      %706 = vmatprep.subr.mxu0 0.0
      %707 = vmatpush2.msra.mxu0 0.0
      %708 = vmatprep.subr.mxu0 0.0
      %709 = vmatpush2.msra.mxu0 0.0
      %710 = vmatprep.subr.mxu0 0.0
      %711 = vmatpush2.msra.mxu0 0.0
      %712 = vmatprep.subr.mxu0 0.0
      %713 = vmatpush2.msra.mxu0 0.0
      %714 = vmatprep.subr.mxu0 0.0
      %715 = vmatpush2.msra.mxu0 0.0
      %716 = vmatprep.subr.mxu0 0.0
      %717 = vmatpush2.msra.mxu0 0.0
      %718 = vmatprep.subr.mxu0 0.0
      %719 = vmatpush2.msra.mxu0 0.0
      %720 = vmatprep.subr.mxu0 0.0
      %721 = vmatpush2.msra.mxu0 0.0
      %722 = vmatprep.subr.mxu0 0.0
      %723 = vmatpush2.msra.mxu0 0.0
      %724 = vmatprep.subr.mxu0 0.0
      %725 = vmatpush2.msra.mxu0 0.0
      %726 = vmatprep.subr.mxu0 0.0
      %727 = vmatpush2.msra.mxu0 0.0
      %728 = vmatprep.subr.mxu0 0.0
      %729 = vmatpush2.msra.mxu0 0.0
      %730 = vmatprep.subr.mxu0 0.0
      %731 = vmatpush2.msra.mxu0 0.0
      %732 = vmatprep.mubr.f32.mxu0 0.0
      %733 = vmatmul.mubr.f32.gmra.mxu0 %v663
      %v734 = vpop.f32.mrf.mxu0
      %v735 = vadd.f32 0.0, %v734
      %v736 = vpop.f32.mrf.mxu0
      %737 = vmatprep.mubr.f32.mxu0 0.0
      %738 = vmatmul.mubr.f32.gmra.mxu0 %v666
      %v739 = vpop.f32.mrf.mxu0
      %v740 = vadd.f32 0.0, %v739
      %v741 = vpop.f32.mrf.mxu0
      %742 = vdwg.mxu0
      %v743 = vadd.f32 %v658, %v735
      %v744 = vadd.f32 %v659, %v740
      %s745 = scalar_lea.vmem %s3, 8
      %v746 = vld [vmem:[%s745] sm:$0xff]
      %v748 = vsel %vm661, %v652, 0
      %v751 = vsel %vm661, %v653, 0
      %753 = vmatprep.subr.mxu0 0.0
      %754 = vmatpush1.msra.mxu0 0.0
      %755 = vmatprep.subr.mxu0 0.0
      %756 = vmatpush1.msra.mxu0 0.0
      %757 = vmatprep.subr.mxu0 0.0
      %758 = vmatpush1.msra.mxu0 0.0
      %759 = vmatprep.subr.mxu0 0.0
      %760 = vmatpush1.msra.mxu0 0.0
      %761 = vmatprep.subr.mxu0 0.0
      %762 = vmatpush1.msra.mxu0 0.0
      %763 = vmatprep.subr.mxu0 0.0
      %764 = vmatpush1.msra.mxu0 0.0
      %765 = vmatprep.subr.mxu0 0.0
      %766 = vmatpush1.msra.mxu0 0.0
      %767 = vmatprep.subr.mxu0 0.0
      %768 = vmatpush1.msra.mxu0 0.0
      %769 = vmatprep.subr.mxu0 0.0
      %770 = vmatpush1.msra.mxu0 0.0
      %771 = vmatprep.subr.mxu0 0.0
      %772 = vmatpush1.msra.mxu0 0.0
      %773 = vmatprep.subr.mxu0 0.0
      %774 = vmatpush1.msra.mxu0 0.0
      %775 = vmatprep.subr.mxu0 0.0
      %776 = vmatpush1.msra.mxu0 0.0
      %777 = vmatprep.subr.mxu0 0.0
      %778 = vmatpush1.msra.mxu0 0.0
      %779 = vmatprep.subr.mxu0 0.0
      %780 = vmatpush1.msra.mxu0 0.0
      %781 = vmatprep.subr.mxu0 0.0
      %782 = vmatpush1.msra.mxu0 0.0
      %783 = vmatprep.subr.mxu0 0.0
      %784 = vmatpush1.msra.mxu0 %v746
      %785 = vmatprep.subr.mxu0 0.0
      %786 = vmatpush2.msra.mxu0 0.0
      %787 = vmatprep.subr.mxu0 0.0
      %788 = vmatpush2.msra.mxu0 0.0
      %789 = vmatprep.subr.mxu0 0.0
      %790 = vmatpush2.msra.mxu0 0.0
      %791 = vmatprep.subr.mxu0 0.0
      %792 = vmatpush2.msra.mxu0 0.0
      %793 = vmatprep.subr.mxu0 0.0
      %794 = vmatpush2.msra.mxu0 0.0
      %795 = vmatprep.subr.mxu0 0.0
      %796 = vmatpush2.msra.mxu0 0.0
      %797 = vmatprep.subr.mxu0 0.0
      %798 = vmatpush2.msra.mxu0 0.0
      %799 = vmatprep.subr.mxu0 0.0
      %800 = vmatpush2.msra.mxu0 0.0
      %801 = vmatprep.subr.mxu0 0.0
      %802 = vmatpush2.msra.mxu0 0.0
      %803 = vmatprep.subr.mxu0 0.0
      %804 = vmatpush2.msra.mxu0 0.0
      %805 = vmatprep.subr.mxu0 0.0
      %806 = vmatpush2.msra.mxu0 0.0
      %807 = vmatprep.subr.mxu0 0.0
      %808 = vmatpush2.msra.mxu0 0.0
      %809 = vmatprep.subr.mxu0 0.0
      %810 = vmatpush2.msra.mxu0 0.0
      %811 = vmatprep.subr.mxu0 0.0
      %812 = vmatpush2.msra.mxu0 0.0
      %813 = vmatprep.subr.mxu0 0.0
      %814 = vmatpush2.msra.mxu0 0.0
      %815 = vmatprep.subr.mxu0 0.0
      %816 = vmatpush2.msra.mxu0 0.0
      %817 = vmatprep.mubr.f32.mxu0 0.0
      %818 = vmatmul.mubr.f32.gmra.mxu0 %v748
      %v819 = vpop.f32.mrf.mxu0
      %v820 = vadd.f32 0.0, %v819
      %v821 = vpop.f32.mrf.mxu0
      %822 = vmatprep.mubr.f32.mxu0 0.0
      %823 = vmatmul.mubr.f32.gmra.mxu0 %v751
      %v824 = vpop.f32.mrf.mxu0
      %v825 = vadd.f32 0.0, %v824
      %v826 = vpop.f32.mrf.mxu0
      %827 = vdwg.mxu0
      %v828 = vadd.f32 %v743, %v820
      %v829 = vadd.f32 %v744, %v825
      %s830 = scalar_lea.vmem %s3, 16
      %v831 = vld [vmem:[%s830] sm:$0xff]
      %v833 = vsel %vm661, %v654, 0
      %v836 = vsel %vm661, %v655, 0
      %838 = vmatprep.subr.mxu0 0.0
      %839 = vmatpush1.msra.mxu0 0.0
      %840 = vmatprep.subr.mxu0 0.0
      %841 = vmatpush1.msra.mxu0 0.0
      %842 = vmatprep.subr.mxu0 0.0
      %843 = vmatpush1.msra.mxu0 0.0
      %844 = vmatprep.subr.mxu0 0.0
      %845 = vmatpush1.msra.mxu0 0.0
      %846 = vmatprep.subr.mxu0 0.0
      %847 = vmatpush1.msra.mxu0 0.0
      %848 = vmatprep.subr.mxu0 0.0
      %849 = vmatpush1.msra.mxu0 0.0
      %850 = vmatprep.subr.mxu0 0.0
      %851 = vmatpush1.msra.mxu0 0.0
      %852 = vmatprep.subr.mxu0 0.0
      %853 = vmatpush1.msra.mxu0 0.0
      %854 = vmatprep.subr.mxu0 0.0
      %855 = vmatpush1.msra.mxu0 0.0
      %856 = vmatprep.subr.mxu0 0.0
      %857 = vmatpush1.msra.mxu0 0.0
      %858 = vmatprep.subr.mxu0 0.0
      %859 = vmatpush1.msra.mxu0 0.0
      %860 = vmatprep.subr.mxu0 0.0
      %861 = vmatpush1.msra.mxu0 0.0
      %862 = vmatprep.subr.mxu0 0.0
      %863 = vmatpush1.msra.mxu0 0.0
      %864 = vmatprep.subr.mxu0 0.0
      %865 = vmatpush1.msra.mxu0 0.0
      %866 = vmatprep.subr.mxu0 0.0
      %867 = vmatpush1.msra.mxu0 0.0
      %868 = vmatprep.subr.mxu0 0.0
      %869 = vmatpush1.msra.mxu0 %v831
      %870 = vmatprep.subr.mxu0 0.0
      %871 = vmatpush2.msra.mxu0 0.0
      %872 = vmatprep.subr.mxu0 0.0
      %873 = vmatpush2.msra.mxu0 0.0
      %874 = vmatprep.subr.mxu0 0.0
      %875 = vmatpush2.msra.mxu0 0.0
      %876 = vmatprep.subr.mxu0 0.0
      %877 = vmatpush2.msra.mxu0 0.0
      %878 = vmatprep.subr.mxu0 0.0
      %879 = vmatpush2.msra.mxu0 0.0
      %880 = vmatprep.subr.mxu0 0.0
      %881 = vmatpush2.msra.mxu0 0.0
      %882 = vmatprep.subr.mxu0 0.0
      %883 = vmatpush2.msra.mxu0 0.0
      %884 = vmatprep.subr.mxu0 0.0
      %885 = vmatpush2.msra.mxu0 0.0
      %886 = vmatprep.subr.mxu0 0.0
      %887 = vmatpush2.msra.mxu0 0.0
      %888 = vmatprep.subr.mxu0 0.0
      %889 = vmatpush2.msra.mxu0 0.0
      %890 = vmatprep.subr.mxu0 0.0
      %891 = vmatpush2.msra.mxu0 0.0
      %892 = vmatprep.subr.mxu0 0.0
      %893 = vmatpush2.msra.mxu0 0.0
      %894 = vmatprep.subr.mxu0 0.0
      %895 = vmatpush2.msra.mxu0 0.0
      %896 = vmatprep.subr.mxu0 0.0
      %897 = vmatpush2.msra.mxu0 0.0
      %898 = vmatprep.subr.mxu0 0.0
      %899 = vmatpush2.msra.mxu0 0.0
      %900 = vmatprep.subr.mxu0 0.0
      %901 = vmatpush2.msra.mxu0 0.0
      %902 = vmatprep.mubr.f32.mxu0 0.0
      %903 = vmatmul.mubr.f32.gmra.mxu0 %v833
      %v904 = vpop.f32.mrf.mxu0
      %v905 = vadd.f32 0.0, %v904
      %v906 = vpop.f32.mrf.mxu0
      %907 = vmatprep.mubr.f32.mxu0 0.0
      %908 = vmatmul.mubr.f32.gmra.mxu0 %v836
      %v909 = vpop.f32.mrf.mxu0
      %v910 = vadd.f32 0.0, %v909
      %v911 = vpop.f32.mrf.mxu0
      %912 = vdwg.mxu0
      %v913 = vadd.f32 %v828, %v905
      %v914 = vadd.f32 %v829, %v910
      %s915 = scalar_lea.vmem %s3, 24
      %v916 = vld [vmem:[%s915] sm:$0xff]
      %v918 = vsel %vm661, %v656, 0
      %v921 = vsel %vm661, %v657, 0
      %923 = vmatprep.subr.mxu0 0.0
      %924 = vmatpush1.msra.mxu0 0.0
      %925 = vmatprep.subr.mxu0 0.0
      %926 = vmatpush1.msra.mxu0 0.0
      %927 = vmatprep.subr.mxu0 0.0
      %928 = vmatpush1.msra.mxu0 0.0
      %929 = vmatprep.subr.mxu0 0.0
      %930 = vmatpush1.msra.mxu0 0.0
      %931 = vmatprep.subr.mxu0 0.0
      %932 = vmatpush1.msra.mxu0 0.0
      %933 = vmatprep.subr.mxu0 0.0
      %934 = vmatpush1.msra.mxu0 0.0
      %935 = vmatprep.subr.mxu0 0.0
      %936 = vmatpush1.msra.mxu0 0.0
      %937 = vmatprep.subr.mxu0 0.0
      %938 = vmatpush1.msra.mxu0 0.0
      %939 = vmatprep.subr.mxu0 0.0
      %940 = vmatpush1.msra.mxu0 0.0
      %941 = vmatprep.subr.mxu0 0.0
      %942 = vmatpush1.msra.mxu0 0.0
      %943 = vmatprep.subr.mxu0 0.0
      %944 = vmatpush1.msra.mxu0 0.0
      %945 = vmatprep.subr.mxu0 0.0
      %946 = vmatpush1.msra.mxu0 0.0
      %947 = vmatprep.subr.mxu0 0.0
      %948 = vmatpush1.msra.mxu0 0.0
      %949 = vmatprep.subr.mxu0 0.0
      %950 = vmatpush1.msra.mxu0 0.0
      %951 = vmatprep.subr.mxu0 0.0
      %952 = vmatpush1.msra.mxu0 0.0
      %953 = vmatprep.subr.mxu0 0.0
      %954 = vmatpush1.msra.mxu0 %v916
      %955 = vmatprep.subr.mxu0 0.0
      %956 = vmatpush2.msra.mxu0 0.0
      %957 = vmatprep.subr.mxu0 0.0
      %958 = vmatpush2.msra.mxu0 0.0
      %959 = vmatprep.subr.mxu0 0.0
      %960 = vmatpush2.msra.mxu0 0.0
      %961 = vmatprep.subr.mxu0 0.0
      %962 = vmatpush2.msra.mxu0 0.0
      %963 = vmatprep.subr.mxu0 0.0
      %964 = vmatpush2.msra.mxu0 0.0
      %965 = vmatprep.subr.mxu0 0.0
      %966 = vmatpush2.msra.mxu0 0.0
      %967 = vmatprep.subr.mxu0 0.0
      %968 = vmatpush2.msra.mxu0 0.0
      %969 = vmatprep.subr.mxu0 0.0
      %970 = vmatpush2.msra.mxu0 0.0
      %971 = vmatprep.subr.mxu0 0.0
      %972 = vmatpush2.msra.mxu0 0.0
      %973 = vmatprep.subr.mxu0 0.0
      %974 = vmatpush2.msra.mxu0 0.0
      %975 = vmatprep.subr.mxu0 0.0
      %976 = vmatpush2.msra.mxu0 0.0
      %977 = vmatprep.subr.mxu0 0.0
      %978 = vmatpush2.msra.mxu0 0.0
      %979 = vmatprep.subr.mxu0 0.0
      %980 = vmatpush2.msra.mxu0 0.0
      %981 = vmatprep.subr.mxu0 0.0
      %982 = vmatpush2.msra.mxu0 0.0
      %983 = vmatprep.subr.mxu0 0.0
      %984 = vmatpush2.msra.mxu0 0.0
      %985 = vmatprep.subr.mxu0 0.0
      %986 = vmatpush2.msra.mxu0 0.0
      %987 = vmatprep.mubr.f32.mxu0 0.0
      %988 = vmatmul.mubr.f32.gmra.mxu0 %v918
      %v989 = vpop.f32.mrf.mxu0
      %v990 = vadd.f32 0.0, %v989
      %v991 = vpop.f32.mrf.mxu0
      %992 = vmatprep.mubr.f32.mxu0 0.0
      %993 = vmatmul.mubr.f32.gmra.mxu0 %v921
      %v994 = vpop.f32.mrf.mxu0
      %v995 = vadd.f32 0.0, %v994
      %v996 = vpop.f32.mrf.mxu0
      %997 = vdwg.mxu0
      %v998 = vadd.f32 %v913, %v990
      %v999 = vadd.f32 %v914, %v995
      %1000 = vst [vmem:[%s226] sm:$0xff] %v998
      %1001 = vst [vmem:[%s226 + $0x8] sm:$0xff] %v999
      %s1002 = smul.u32 2, %s16
      %p1003 = scmp.lt.s32.totalorder %s1002, 3
      %s1004 = scalar_select %p1003, %s1002, 3
      %s1005 = smul.addr %s1004, 8
      %s1006 = scalar_lea.vmem %s5, %s1005
      // Predicated region
      $region41: #{efficient_vit_transformer.1} parent=39 // pred_check
        %p1007 = pneg %p144
      $region42: #{efficient_vit_transformer.1} parent=39 // pred_check_branch
        %1009 = sbr.rel (%p1007) target = $region44
      $region43: #{efficient_vit_transformer.1} parent=39 // pred_region
        %s1010 = smul.u32 2, %s16
      $region44: #{efficient_vit_transformer.1} parent=39 // pred_fallthru
        _
    $region40: #{efficient_vit_transformer.1} parent=5 // pred_fallthru
      _
    %p1011 = scmp.le.s32.totalorder 2, %s11
    // Predicated region
    $region45: #{efficient_vit_transformer.1} parent=5 // pred_check
      %p1012 = pneg %p1011
    $region46: #{efficient_vit_transformer.1} parent=5 // pred_check_branch
      %1014 = sbr.rel (%p1012) target = $region48
    $region47: #{efficient_vit_transformer.1} parent=5 // pred_region
      %s1015 = ssub.s32 %s11, 2
      // Predicated region
      $region49: #{efficient_vit_transformer.1} parent=47 // pred_check
        %p1016 = pneg %p150
      $region50: #{efficient_vit_transformer.1} parent=47 // pred_check_branch
        %1018 = sbr.rel (%p1016) target = $region52
      $region51: #{efficient_vit_transformer.1} parent=47 // pred_region
        %s1019 = smul.u32 2, %s17
        %p1020 = scmp.lt.s32.totalorder %s1019, 3
        %s1021 = scalar_select %p1020, %s1019, 3
        %s1022 = smul.addr %s1021, 8
        %s1023 = scalar_lea.vmem %s5, %s1022
      $region52: #{efficient_vit_transformer.1} parent=47 // pred_fallthru
        _
    $region48: #{efficient_vit_transformer.1} parent=5 // pred_fallthru
      _
  $region6: #{efficient_vit_transformer.1} parent=0 // loop_footer
    %s15 = sadd.s32 1, %s11
  $region7: #{efficient_vit_transformer.1} parent=0 // loop_footer_branch
    %10 = sbr.rel target = $region3
  $region8: #{efficient_vit_transformer.1} parent=0 // loop_exit
    _

</llo_original>
